<compile_context>
chip_gen: v5e
topology: v5e:2x2
jax: 0.10.0
libtpu: 0.0.40
codegen_flags: <defaults>
</compile_context>

<pallas_src>
import functools

import jax
import jax.numpy as jnp
from jax import lax
from jax.experimental import pallas as pl
from jax.experimental.pallas import tpu as pltpu


def _round_up(x, m):
    return (x + m - 1) // m * m


def _vmem_capacity_bytes():
    """Per-core VMEM capacity; conservative fallback if the query is unavailable."""
    try:
        return int(pltpu.get_tpu_info().vmem_capacity_bytes)
    except Exception:
        return 64 * 1024 * 1024  # v7x per-core VMEM (smallest of the targets)


def _const_spec(shape):
    """BlockSpec for a block whose index never changes (weights / biases).

    Single-buffered when the installed Pallas supports pipeline_mode (avoids a
    second Hp x Hp copy of Wh in VMEM); falls back to the default otherwise.
    """
    index_map = lambda *_: (0,) * len(shape)
    try:
        return pl.BlockSpec(shape, index_map, pipeline_mode=pl.Buffered(1))
    except (TypeError, AttributeError):
        return pl.BlockSpec(shape, index_map)


def mgu_kernel(x_ref, wx_ref, bx_ref, wh_ref, bh_ref, out_ref, g_ref, h_ref):
    """One (batch tile, time tile) step of the MGU recurrence.

    x_ref  : (Tt, Bt, E)   param_dtype  input tile (time-major)
    wx_ref : (E, Hp)       param_dtype  input projection weight   (resident)
    bx_ref : (1, Hp)       f32          input projection bias     (resident)
    wh_ref : (Hp, Hp)      param_dtype  hidden projection weight  (resident)
    bh_ref : (1, Hp)       f32          hidden projection bias    (resident)
    out_ref: (Tt, Bt, Hp)  f32          hidden states for this tile
    g_ref  : (Tt, Bt, Hp)  param_dtype  VMEM scratch: per-tile gates
    h_ref  : (Bt, Hp)      f32          VMEM scratch: hidden carry across tiles
    """
    # Fresh hidden state at the start of each batch tile's time sweep
    # (time is the innermost, 'arbitrary' grid axis).
    @pl.when(pl.program_id(1) == 0)
    def _():
        h_ref[...] = jnp.zeros_like(h_ref)

    t_tile, bt, hp = out_ref.shape
    e = x_ref.shape[-1]

    # ---- Input projection + sigmoid for the whole tile: one MXU matmul,
    #      off the serial recurrence path. ----
    x2 = x_ref[...].reshape(t_tile * bt, e)
    z = jnp.dot(x2, wx_ref[...], preferred_element_type=jnp.float32)
    z = z + bx_ref[...]
    gates = 1.0 / (1.0 + jnp.exp(-z))
    g_ref[...] = gates.reshape(t_tile, bt, hp).astype(g_ref.dtype)

    # ---- Serial recurrence; loop-invariant loads / broadcasts hoisted. ----
    wh = wh_ref[...]
    bh = jnp.broadcast_to(bh_ref[...], (bt, hp))
    mxu_dtype = wh.dtype

    def body(t, h_prev):
        gate = g_ref[t].astype(jnp.float32)                       # (Bt, Hp)
        h_cand = jnp.tanh(
            jnp.dot(h_prev.astype(mxu_dtype), wh,
                    preferred_element_type=jnp.float32) + bh)
        # h_prev*g + (1-g)*h_cand  ==  h_cand + g*(h_prev - h_cand)  (1 FMA)
        h_new = h_cand + gate * (h_prev - h_cand)
        out_ref[t] = h_new
        return h_new

    # Carry h in registers; cap the unroll so large tiles do not spill.
    unroll = True if t_tile <= 16 else 8
    h_ref[...] = lax.fori_loop(0, t_tile, body, h_ref[...], unroll=unroll)


def mgu_forward(x_bte, wx, bx, wh, bh, *, param_dtype=jnp.bfloat16):
    """MGU forward. x_bte: (B, T, E), batch-major like PyTorch; returns (B, T, H) f32.

    param_dtype controls the MXU / storage dtype of Wx, Wh and the streamed x
    (bf16 by default). The hidden carry, biases and gated blend are always f32.
    """
    B, T, E = x_bte.shape
    H = wx.shape[1]
    f32 = jnp.float32

    LANE, SUB = 128, 8
    Hp = _round_up(H, LANE)

    # --- Batch tile bounded by vreg pressure (~3 live (Bt, Hp) f32 arrays). ---
    bt_cap = max(SUB, (8192 // Hp) // SUB * SUB)
    Bt = min(_round_up(B, SUB), bt_cap)
    Bp = _round_up(B, Bt)

    # --- Time tile derived from a per-chip VMEM budget. ---
    p_isize = jnp.dtype(param_dtype).itemsize
    vmem_cap = _vmem_capacity_bytes()
    vmem_budget = int(vmem_cap * 0.4)          # headroom for compiler scratch
    e_lanes = _round_up(E, LANE)               # lane-padded VMEM footprint of x
    per_t = Bt * (2 * e_lanes * p_isize        # x tile (double-buffered)
                  + 2 * Hp * 4                 # out tile (double-buffered)
                  + Hp * p_isize)              # gate scratch (single)
    fixed = ((Hp * Hp + _round_up(E, SUB) * Hp) * 2 * p_isize  # weights (conservative 2x)
             + 2 * SUB * Hp * 4                                # biases
             + Bt * Hp * 4)                                    # hidden carry
    Tt = int(max(1, min(T, 512, (vmem_budget - fixed) // per_t)))
    Tp = _round_up(T, Tt)

    # --- Lay out operands; padding skipped when already aligned (common case). ---
    x_t = jnp.transpose(x_bte, (1, 0, 2)).astype(param_dtype)   # (T, B, E) — cheap, E-sized
    if (Tp, Bp) != (T, B):
        x_p = jnp.zeros((Tp, Bp, E), param_dtype).at[:T, :B, :].set(x_t)
    else:
        x_p = x_t

    if Hp != H:
        wx_p = jnp.zeros((E, Hp), param_dtype).at[:, :H].set(wx.astype(param_dtype))
        wh_p = jnp.zeros((Hp, Hp), param_dtype).at[:H, :H].set(wh.astype(param_dtype))
        bx_p = jnp.zeros((1, Hp), f32).at[0, :H].set(bx.astype(f32))
        bh_p = jnp.zeros((1, Hp), f32).at[0, :H].set(bh.astype(f32))
    else:
        wx_p = wx.astype(param_dtype)
        wh_p = wh.astype(param_dtype)
        bx_p = bx.astype(f32).reshape(1, H)
        bh_p = bh.astype(f32).reshape(1, H)

    grid = (Bp // Bt, Tp // Tt)

    flops = 2 * Tp * Bp * Hp * (Hp + E)
    bytes_accessed = (Tp * Bp * E * p_isize + Tp * Bp * Hp * 4
                      + Hp * Hp * p_isize + E * Hp * p_isize + 2 * Hp * 4)

    out_tbh = pl.pallas_call(
        mgu_kernel,
        out_shape=jax.ShapeDtypeStruct((Tp, Bp, Hp), f32),
        grid_spec=pltpu.PrefetchScalarGridSpec(
            num_scalar_prefetch=0,
            grid=grid,
            in_specs=[
                pl.BlockSpec((Tt, Bt, E), lambda b, t: (t, b, 0)),   # x tile
                _const_spec((E, Hp)),                                # Wx (resident)
                _const_spec((1, Hp)),                                # bx (resident)
                _const_spec((Hp, Hp)),                               # Wh (resident)
                _const_spec((1, Hp)),                                # bh (resident)
            ],
            out_specs=pl.BlockSpec((Tt, Bt, Hp), lambda b, t: (t, b, 0)),
            scratch_shapes=[
                pltpu.VMEM((Tt, Bt, Hp), param_dtype),   # per-tile gates
                pltpu.VMEM((Bt, Hp), f32),               # hidden carry
            ],
        ),
        compiler_params=pltpu.CompilerParams(
            dimension_semantics=("parallel", "arbitrary"),  # batch || , time serial
            vmem_limit_bytes=int(vmem_cap * 0.9),
        ),
        cost_estimate=pl.CostEstimate(
            flops=flops,
            transcendentals=2 * Tp * Bp * Hp,
            bytes_accessed=bytes_accessed,
        ),
    )(x_p, wx_p, bx_p, wh_p, bh_p)

    # TODO(synk): if the consumer can take time-major (T, B, H), return
    # out_tbh[:T, :B, :H] directly and save this final HBM transpose pass.
    return jnp.transpose(out_tbh[:T, :B, :H], (1, 0, 2))


def mgu_reference(x_bte, wx, bx, wh, bh):
    """Pure-JAX f32 reference mirroring the PyTorch forward."""
    B, T, E = x_bte.shape
    g_all = jax.nn.sigmoid(x_bte @ wx + bx)           # (B, T, H)
    h = jnp.zeros((B, wx.shape[1]), jnp.float32)
    outs = []
    for t in range(T):
        g = g_all[:, t, :]
        h = h * g + (1.0 - g) * jnp.tanh(h @ wh + bh)
        outs.append(h)
    return jnp.stack(outs, axis=1)


if __name__ == "__main__":
    # Small shapes consistent with the module's forward:
    #   input (batch, path_length, emb_dim) = (2, 8, 16), hidden = 32.
    B, T, E, H = 2, 8, 16, 32

    key = jax.random.PRNGKey(0)
    kx, kwx, kbx, kwh, kbh = jax.random.split(key, 5)

    x = jax.random.normal(kx, (B, T, E), dtype=jnp.float32)
    wx = jax.random.normal(kwx, (E, H), dtype=jnp.float32) * 0.1
    bx = jax.random.normal(kbx, (H,), dtype=jnp.float32) * 0.1
    wh = jax.random.normal(kwh, (H, H), dtype=jnp.float32) * 0.1
    bh = jax.random.normal(kbh, (H,), dtype=jnp.float32) * 0.1

    ref = mgu_reference(x, wx, bx, wh, bh)

    # Exactness check: f32 weights everywhere -> must match the pure-JAX ref.
    fwd_f32 = jax.jit(functools.partial(mgu_forward, param_dtype=jnp.float32))
    out_f32 = jax.block_until_ready(fwd_f32(x, wx, bx, wh, bh))
    assert out_f32.shape == (B, T, H)
    assert jnp.allclose(out_f32, ref, atol=1e-4, rtol=1e-4), "f32 mismatch vs reference"

    # Default (performance) path: bf16 weights / MXU, f32 hidden carry.
    fwd = jax.jit(mgu_forward)
    out = jax.block_until_ready(fwd(x, wx, bx, wh, bh))
    assert out.shape == (B, T, H)
    assert jnp.allclose(out, ref, atol=3e-2, rtol=3e-2), "bf16 mismatch vs reference"

    print("KERNEL_OK")
</pallas_src>

<mosaic_0001>
module attributes {stable_mosaic.version = 11 : i64} {
  func.func @mgu_kernel(%arg0: i32, %arg1: i32, %arg2: memref<8x8x16xf32, #tpu.memory_space<vmem>>, %arg3: memref<16x128xf32, #tpu.memory_space<vmem>>, %arg4: memref<1x128xf32, #tpu.memory_space<vmem>>, %arg5: memref<128x128xf32, #tpu.memory_space<vmem>>, %arg6: memref<1x128xf32, #tpu.memory_space<vmem>>, %arg7: memref<8x8x128xf32, #tpu.memory_space<vmem>>, %arg8: memref<8x8x128xf32, #tpu.memory_space<vmem>>, %arg9: memref<8x128xf32, #tpu.memory_space<vmem>>) attributes {dimension_semantics = [#tpu.dimension_semantics<parallel>, #tpu.dimension_semantics<arbitrary>], iteration_bounds = array<i64: 1, 1>, scalar_prefetch = 0 : i64, scratch_operands = 2 : i64, tpu.core_type = #tpu.core_type<tc>, window_params = [{transform_indices = @transform_0, window_bounds = array<i64: 8, 8, 16>}, {pipeline_mode = #tpu.pipeline_mode<synchronous>, transform_indices = @transform_1, window_bounds = array<i64: 16, 128>}, {pipeline_mode = #tpu.pipeline_mode<synchronous>, transform_indices = @transform_2, window_bounds = array<i64: 1, 128>}, {pipeline_mode = #tpu.pipeline_mode<synchronous>, transform_indices = @transform_3, window_bounds = array<i64: 128, 128>}, {pipeline_mode = #tpu.pipeline_mode<synchronous>, transform_indices = @transform_4, window_bounds = array<i64: 1, 128>}, {transform_indices = @transform_5, window_bounds = array<i64: 8, 8, 128>}]} {
    %c0_i32 = arith.constant 0 : i32
    %0 = arith.cmpi eq, %arg1, %c0_i32 : i32
    %1 = arith.extui %0 : i1 to i32
    %c0_i32_0 = arith.constant 0 : i32
    %2 = arith.cmpi ne, %1, %c0_i32_0 : i32
    scf.if %2 {
      %cst_62 = arith.constant 0.000000e+00 : f32
      %129 = vector.broadcast %cst_62 : f32 to vector<8x128xf32>
      %c0_63 = arith.constant 0 : index
      %c0_64 = arith.constant 0 : index
      %130 = vector.load %arg9[%c0_63, %c0_64] : memref<8x128xf32, #tpu.memory_space<vmem>>, vector<8x128xf32>
      tpu.vector_store %arg9[%c0_63, %c0_64], %129 {strides = array<i32>} : memref<8x128xf32, #tpu.memory_space<vmem>>, vector<8x128xf32>,
    } else {
    }
    %c0 = arith.constant 0 : index
    %c0_1 = arith.constant 0 : index
    %c0_2 = arith.constant 0 : index
    %3 = vector.load %arg2[%c0, %c0_1, %c0_2] : memref<8x8x16xf32, #tpu.memory_space<vmem>>, vector<8x8x16xf32>
    %4 = vector.shape_cast %3 : vector<8x8x16xf32> to vector<64x16xf32>
    %c0_3 = arith.constant 0 : index
    %c0_4 = arith.constant 0 : index
    %5 = vector.load %arg3[%c0_3, %c0_4] : memref<16x128xf32, #tpu.memory_space<vmem>>, vector<16x128xf32>
    %cst = arith.constant dense<0.000000e+00> : vector<64x128xf32>
    %6 = tpu.matmul %4, %5, %cst {dimension_numbers = #tpu.dot_dimension_numbers<[1], [0], [0], [1], [0, 0, 1, 1], [], []>} : vector<64x16xf32>, vector<16x128xf32>, vector<64x128xf32> -> vector<64x128xf32>
    %c0_5 = arith.constant 0 : index
    %c0_6 = arith.constant 0 : index
    %7 = vector.load %arg4[%c0_5, %c0_6] : memref<1x128xf32, #tpu.memory_space<vmem>>, vector<1x128xf32>
    %8 = vector.broadcast %7 : vector<1x128xf32> to vector<64x128xf32>
    %9 = arith.addf %6, %8 : vector<64x128xf32>
    %cst_7 = arith.constant 0.000000e+00 : f32
    %10 = vector.broadcast %cst_7 : f32 to vector<64x128xf32>
    %11 = arith.subf %10, %9 : vector<64x128xf32>
    %12 = math.exp %11 : vector<64x128xf32>
    %cst_8 = arith.constant 1.000000e+00 : f32
    %13 = vector.broadcast %cst_8 : f32 to vector<64x128xf32>
    %14 = arith.addf %13, %12 : vector<64x128xf32>
    %cst_9 = arith.constant 1.000000e+00 : f32
    %15 = vector.broadcast %cst_9 : f32 to vector<64x128xf32>
    %16 = arith.divf %15, %14 : vector<64x128xf32>
    %17 = vector.shape_cast %16 : vector<64x128xf32> to vector<8x8x128xf32>
    %c0_10 = arith.constant 0 : index
    %c0_11 = arith.constant 0 : index
    %c0_12 = arith.constant 0 : index
    %18 = vector.load %arg8[%c0_10, %c0_11, %c0_12] : memref<8x8x128xf32, #tpu.memory_space<vmem>>, vector<8x8x128xf32>
    tpu.vector_store %arg8[%c0_10, %c0_11, %c0_12], %17 {strides = array<i32>} : memref<8x8x128xf32, #tpu.memory_space<vmem>>, vector<8x8x128xf32>,
    %c0_13 = arith.constant 0 : index
    %c0_14 = arith.constant 0 : index
    %19 = vector.load %arg5[%c0_13, %c0_14] : memref<128x128xf32, #tpu.memory_space<vmem>>, vector<128x128xf32>
    %c0_15 = arith.constant 0 : index
    %c0_16 = arith.constant 0 : index
    %20 = vector.load %arg6[%c0_15, %c0_16] : memref<1x128xf32, #tpu.memory_space<vmem>>, vector<1x128xf32>
    %21 = vector.shape_cast %20 : vector<1x128xf32> to vector<1x128xf32>
    %22 = vector.broadcast %21 : vector<1x128xf32> to vector<8x128xf32>
    %c0_17 = arith.constant 0 : index
    %c0_18 = arith.constant 0 : index
    %23 = vector.load %arg9[%c0_17, %c0_18] : memref<8x128xf32, #tpu.memory_space<vmem>>, vector<8x128xf32>
    %c0_i32_19 = arith.constant 0 : i32
    %24 = arith.index_cast %c0_i32_19 : i32 to index
    %c0_20 = arith.constant 0 : index
    %c0_21 = arith.constant 0 : index
    %25 = vector.load %arg8[%24, %c0_20, %c0_21] : memref<8x8x128xf32, #tpu.memory_space<vmem>>, vector<1x8x128xf32>
    %26 = vector.shape_cast %25 : vector<1x8x128xf32> to vector<8x128xf32>
    %cst_22 = arith.constant dense<0.000000e+00> : vector<8x128xf32>
    %27 = tpu.matmul %23, %19, %cst_22 {dimension_numbers = #tpu.dot_dimension_numbers<[1], [0], [0], [1], [0, 0, 1, 1], [], []>} : vector<8x128xf32>, vector<128x128xf32>, vector<8x128xf32> -> vector<8x128xf32>
    %28 = arith.addf %27, %22 : vector<8x128xf32>
    %29 = math.tanh %28 : vector<8x128xf32>
    %30 = arith.subf %23, %29 : vector<8x128xf32>
    %31 = arith.mulf %26, %30 : vector<8x128xf32>
    %32 = arith.addf %29, %31 : vector<8x128xf32>
    %33 = arith.index_cast %c0_i32_19 : i32 to index
    %c0_23 = arith.constant 0 : index
    %c0_24 = arith.constant 0 : index
    %34 = vector.load %arg7[%33, %c0_23, %c0_24] : memref<8x8x128xf32, #tpu.memory_space<vmem>>, vector<1x8x128xf32>
    %35 = vector.shape_cast %34 : vector<1x8x128xf32> to vector<8x128xf32>
    %36 = vector.shape_cast %32 : vector<8x128xf32> to vector<1x8x128xf32>
    tpu.vector_store %arg7[%33, %c0_23, %c0_24], %36 {strides = array<i32>} : memref<8x8x128xf32, #tpu.memory_space<vmem>>, vector<1x8x128xf32>,
    %c1_i32 = arith.constant 1 : i32
    %37 = arith.index_cast %c1_i32 : i32 to index
    %c0_25 = arith.constant 0 : index
    %c0_26 = arith.constant 0 : index
    %38 = vector.load %arg8[%37, %c0_25, %c0_26] : memref<8x8x128xf32, #tpu.memory_space<vmem>>, vector<1x8x128xf32>
    %39 = vector.shape_cast %38 : vector<1x8x128xf32> to vector<8x128xf32>
    %cst_27 = arith.constant dense<0.000000e+00> : vector<8x128xf32>
    %40 = tpu.matmul %32, %19, %cst_27 {dimension_numbers = #tpu.dot_dimension_numbers<[1], [0], [0], [1], [0, 0, 1, 1], [], []>} : vector<8x128xf32>, vector<128x128xf32>, vector<8x128xf32> -> vector<8x128xf32>
    %41 = arith.addf %40, %22 : vector<8x128xf32>
    %42 = math.tanh %41 : vector<8x128xf32>
    %43 = arith.subf %32, %42 : vector<8x128xf32>
    %44 = arith.mulf %39, %43 : vector<8x128xf32>
    %45 = arith.addf %42, %44 : vector<8x128xf32>
    %46 = arith.index_cast %c1_i32 : i32 to index
    %c0_28 = arith.constant 0 : index
    %c0_29 = arith.constant 0 : index
    %47 = vector.load %arg7[%46, %c0_28, %c0_29] : memref<8x8x128xf32, #tpu.memory_space<vmem>>, vector<1x8x128xf32>
    %48 = vector.shape_cast %47 : vector<1x8x128xf32> to vector<8x128xf32>
    %49 = vector.shape_cast %45 : vector<8x128xf32> to vector<1x8x128xf32>
    tpu.vector_store %arg7[%46, %c0_28, %c0_29], %49 {strides = array<i32>} : memref<8x8x128xf32, #tpu.memory_space<vmem>>, vector<1x8x128xf32>,
    %c2_i32 = arith.constant 2 : i32
    %50 = arith.index_cast %c2_i32 : i32 to index
    %c0_30 = arith.constant 0 : index
    %c0_31 = arith.constant 0 : index
    %51 = vector.load %arg8[%50, %c0_30, %c0_31] : memref<8x8x128xf32, #tpu.memory_space<vmem>>, vector<1x8x128xf32>
    %52 = vector.shape_cast %51 : vector<1x8x128xf32> to vector<8x128xf32>
    %cst_32 = arith.constant dense<0.000000e+00> : vector<8x128xf32>
    %53 = tpu.matmul %45, %19, %cst_32 {dimension_numbers = #tpu.dot_dimension_numbers<[1], [0], [0], [1], [0, 0, 1, 1], [], []>} : vector<8x128xf32>, vector<128x128xf32>, vector<8x128xf32> -> vector<8x128xf32>
    %54 = arith.addf %53, %22 : vector<8x128xf32>
    %55 = math.tanh %54 : vector<8x128xf32>
    %56 = arith.subf %45, %55 : vector<8x128xf32>
    %57 = arith.mulf %52, %56 : vector<8x128xf32>
    %58 = arith.addf %55, %57 : vector<8x128xf32>
    %59 = arith.index_cast %c2_i32 : i32 to index
    %c0_33 = arith.constant 0 : index
    %c0_34 = arith.constant 0 : index
    %60 = vector.load %arg7[%59, %c0_33, %c0_34] : memref<8x8x128xf32, #tpu.memory_space<vmem>>, vector<1x8x128xf32>
    %61 = vector.shape_cast %60 : vector<1x8x128xf32> to vector<8x128xf32>
    %62 = vector.shape_cast %58 : vector<8x128xf32> to vector<1x8x128xf32>
    tpu.vector_store %arg7[%59, %c0_33, %c0_34], %62 {strides = array<i32>} : memref<8x8x128xf32, #tpu.memory_space<vmem>>, vector<1x8x128xf32>,
    %c3_i32 = arith.constant 3 : i32
    %63 = arith.index_cast %c3_i32 : i32 to index
    %c0_35 = arith.constant 0 : index
    %c0_36 = arith.constant 0 : index
    %64 = vector.load %arg8[%63, %c0_35, %c0_36] : memref<8x8x128xf32, #tpu.memory_space<vmem>>, vector<1x8x128xf32>
    %65 = vector.shape_cast %64 : vector<1x8x128xf32> to vector<8x128xf32>
    %cst_37 = arith.constant dense<0.000000e+00> : vector<8x128xf32>
    %66 = tpu.matmul %58, %19, %cst_37 {dimension_numbers = #tpu.dot_dimension_numbers<[1], [0], [0], [1], [0, 0, 1, 1], [], []>} : vector<8x128xf32>, vector<128x128xf32>, vector<8x128xf32> -> vector<8x128xf32>
    %67 = arith.addf %66, %22 : vector<8x128xf32>
    %68 = math.tanh %67 : vector<8x128xf32>
    %69 = arith.subf %58, %68 : vector<8x128xf32>
    %70 = arith.mulf %65, %69 : vector<8x128xf32>
    %71 = arith.addf %68, %70 : vector<8x128xf32>
    %72 = arith.index_cast %c3_i32 : i32 to index
    %c0_38 = arith.constant 0 : index
    %c0_39 = arith.constant 0 : index
    %73 = vector.load %arg7[%72, %c0_38, %c0_39] : memref<8x8x128xf32, #tpu.memory_space<vmem>>, vector<1x8x128xf32>
    %74 = vector.shape_cast %73 : vector<1x8x128xf32> to vector<8x128xf32>
    %75 = vector.shape_cast %71 : vector<8x128xf32> to vector<1x8x128xf32>
    tpu.vector_store %arg7[%72, %c0_38, %c0_39], %75 {strides = array<i32>} : memref<8x8x128xf32, #tpu.memory_space<vmem>>, vector<1x8x128xf32>,
    %c4_i32 = arith.constant 4 : i32
    %76 = arith.index_cast %c4_i32 : i32 to index
    %c0_40 = arith.constant 0 : index
    %c0_41 = arith.constant 0 : index
    %77 = vector.load %arg8[%76, %c0_40, %c0_41] : memref<8x8x128xf32, #tpu.memory_space<vmem>>, vector<1x8x128xf32>
    %78 = vector.shape_cast %77 : vector<1x8x128xf32> to vector<8x128xf32>
    %cst_42 = arith.constant dense<0.000000e+00> : vector<8x128xf32>
    %79 = tpu.matmul %71, %19, %cst_42 {dimension_numbers = #tpu.dot_dimension_numbers<[1], [0], [0], [1], [0, 0, 1, 1], [], []>} : vector<8x128xf32>, vector<128x128xf32>, vector<8x128xf32> -> vector<8x128xf32>
    %80 = arith.addf %79, %22 : vector<8x128xf32>
    %81 = math.tanh %80 : vector<8x128xf32>
    %82 = arith.subf %71, %81 : vector<8x128xf32>
    %83 = arith.mulf %78, %82 : vector<8x128xf32>
    %84 = arith.addf %81, %83 : vector<8x128xf32>
    %85 = arith.index_cast %c4_i32 : i32 to index
    %c0_43 = arith.constant 0 : index
    %c0_44 = arith.constant 0 : index
    %86 = vector.load %arg7[%85, %c0_43, %c0_44] : memref<8x8x128xf32, #tpu.memory_space<vmem>>, vector<1x8x128xf32>
    %87 = vector.shape_cast %86 : vector<1x8x128xf32> to vector<8x128xf32>
    %88 = vector.shape_cast %84 : vector<8x128xf32> to vector<1x8x128xf32>
    tpu.vector_store %arg7[%85, %c0_43, %c0_44], %88 {strides = array<i32>} : memref<8x8x128xf32, #tpu.memory_space<vmem>>, vector<1x8x128xf32>,
    %c5_i32 = arith.constant 5 : i32
    %89 = arith.index_cast %c5_i32 : i32 to index
    %c0_45 = arith.constant 0 : index
    %c0_46 = arith.constant 0 : index
    %90 = vector.load %arg8[%89, %c0_45, %c0_46] : memref<8x8x128xf32, #tpu.memory_space<vmem>>, vector<1x8x128xf32>
    %91 = vector.shape_cast %90 : vector<1x8x128xf32> to vector<8x128xf32>
    %cst_47 = arith.constant dense<0.000000e+00> : vector<8x128xf32>
    %92 = tpu.matmul %84, %19, %cst_47 {dimension_numbers = #tpu.dot_dimension_numbers<[1], [0], [0], [1], [0, 0, 1, 1], [], []>} : vector<8x128xf32>, vector<128x128xf32>, vector<8x128xf32> -> vector<8x128xf32>
    %93 = arith.addf %92, %22 : vector<8x128xf32>
    %94 = math.tanh %93 : vector<8x128xf32>
    %95 = arith.subf %84, %94 : vector<8x128xf32>
    %96 = arith.mulf %91, %95 : vector<8x128xf32>
    %97 = arith.addf %94, %96 : vector<8x128xf32>
    %98 = arith.index_cast %c5_i32 : i32 to index
    %c0_48 = arith.constant 0 : index
    %c0_49 = arith.constant 0 : index
    %99 = vector.load %arg7[%98, %c0_48, %c0_49] : memref<8x8x128xf32, #tpu.memory_space<vmem>>, vector<1x8x128xf32>
    %100 = vector.shape_cast %99 : vector<1x8x128xf32> to vector<8x128xf32>
    %101 = vector.shape_cast %97 : vector<8x128xf32> to vector<1x8x128xf32>
    tpu.vector_store %arg7[%98, %c0_48, %c0_49], %101 {strides = array<i32>} : memref<8x8x128xf32, #tpu.memory_space<vmem>>, vector<1x8x128xf32>,
    %c6_i32 = arith.constant 6 : i32
    %102 = arith.index_cast %c6_i32 : i32 to index
    %c0_50 = arith.constant 0 : index
    %c0_51 = arith.constant 0 : index
    %103 = vector.load %arg8[%102, %c0_50, %c0_51] : memref<8x8x128xf32, #tpu.memory_space<vmem>>, vector<1x8x128xf32>
    %104 = vector.shape_cast %103 : vector<1x8x128xf32> to vector<8x128xf32>
    %cst_52 = arith.constant dense<0.000000e+00> : vector<8x128xf32>
    %105 = tpu.matmul %97, %19, %cst_52 {dimension_numbers = #tpu.dot_dimension_numbers<[1], [0], [0], [1], [0, 0, 1, 1], [], []>} : vector<8x128xf32>, vector<128x128xf32>, vector<8x128xf32> -> vector<8x128xf32>
    %106 = arith.addf %105, %22 : vector<8x128xf32>
    %107 = math.tanh %106 : vector<8x128xf32>
    %108 = arith.subf %97, %107 : vector<8x128xf32>
    %109 = arith.mulf %104, %108 : vector<8x128xf32>
    %110 = arith.addf %107, %109 : vector<8x128xf32>
    %111 = arith.index_cast %c6_i32 : i32 to index
    %c0_53 = arith.constant 0 : index
    %c0_54 = arith.constant 0 : index
    %112 = vector.load %arg7[%111, %c0_53, %c0_54] : memref<8x8x128xf32, #tpu.memory_space<vmem>>, vector<1x8x128xf32>
    %113 = vector.shape_cast %112 : vector<1x8x128xf32> to vector<8x128xf32>
    %114 = vector.shape_cast %110 : vector<8x128xf32> to vector<1x8x128xf32>
    tpu.vector_store %arg7[%111, %c0_53, %c0_54], %114 {strides = array<i32>} : memref<8x8x128xf32, #tpu.memory_space<vmem>>, vector<1x8x128xf32>,
    %c7_i32 = arith.constant 7 : i32
    %115 = arith.index_cast %c7_i32 : i32 to index
    %c0_55 = arith.constant 0 : index
    %c0_56 = arith.constant 0 : index
    %116 = vector.load %arg8[%115, %c0_55, %c0_56] : memref<8x8x128xf32, #tpu.memory_space<vmem>>, vector<1x8x128xf32>
    %117 = vector.shape_cast %116 : vector<1x8x128xf32> to vector<8x128xf32>
    %cst_57 = arith.constant dense<0.000000e+00> : vector<8x128xf32>
    %118 = tpu.matmul %110, %19, %cst_57 {dimension_numbers = #tpu.dot_dimension_numbers<[1], [0], [0], [1], [0, 0, 1, 1], [], []>} : vector<8x128xf32>, vector<128x128xf32>, vector<8x128xf32> -> vector<8x128xf32>
    %119 = arith.addf %118, %22 : vector<8x128xf32>
    %120 = math.tanh %119 : vector<8x128xf32>
    %121 = arith.subf %110, %120 : vector<8x128xf32>
    %122 = arith.mulf %117, %121 : vector<8x128xf32>
    %123 = arith.addf %120, %122 : vector<8x128xf32>
    %124 = arith.index_cast %c7_i32 : i32 to index
    %c0_58 = arith.constant 0 : index
    %c0_59 = arith.constant 0 : index
    %125 = vector.load %arg7[%124, %c0_58, %c0_59] : memref<8x8x128xf32, #tpu.memory_space<vmem>>, vector<1x8x128xf32>
    %126 = vector.shape_cast %125 : vector<1x8x128xf32> to vector<8x128xf32>
    %127 = vector.shape_cast %123 : vector<8x128xf32> to vector<1x8x128xf32>
    tpu.vector_store %arg7[%124, %c0_58, %c0_59], %127 {strides = array<i32>} : memref<8x8x128xf32, #tpu.memory_space<vmem>>, vector<1x8x128xf32>,
    %c8_i32 = arith.constant 8 : i32
    %c0_60 = arith.constant 0 : index
    %c0_61 = arith.constant 0 : index
    %128 = vector.load %arg9[%c0_60, %c0_61] : memref<8x128xf32, #tpu.memory_space<vmem>>, vector<8x128xf32>
    tpu.vector_store %arg9[%c0_60, %c0_61], %123 {strides = array<i32>} : memref<8x128xf32, #tpu.memory_space<vmem>>, vector<8x128xf32>,
    return
  }
  func.func @transform_0(%arg0: i32, %arg1: i32) -> (i32, i32, i32) {
    %c0_i32 = arith.constant 0 : i32
    %c0_i32_0 = arith.constant 0 : i32
    return %arg1, %arg0, %c0_i32 : i32, i32, i32
  }
  func.func @transform_1(%arg0: i32, %arg1: i32) -> (i32, i32) {
    %c0_i32 = arith.constant 0 : i32
    %c0_i32_0 = arith.constant 0 : i32
    %c0_i32_1 = arith.constant 0 : i32
    return %c0_i32, %c0_i32_0 : i32, i32
  }
  func.func @transform_2(%arg0: i32, %arg1: i32) -> (i32, i32) {
    %c0_i32 = arith.constant 0 : i32
    %c0_i32_0 = arith.constant 0 : i32
    %c0_i32_1 = arith.constant 0 : i32
    return %c0_i32, %c0_i32_0 : i32, i32
  }
  func.func @transform_3(%arg0: i32, %arg1: i32) -> (i32, i32) {
    %c0_i32 = arith.constant 0 : i32
    %c0_i32_0 = arith.constant 0 : i32
    %c0_i32_1 = arith.constant 0 : i32
    return %c0_i32, %c0_i32_0 : i32, i32
  }
  func.func @transform_4(%arg0: i32, %arg1: i32) -> (i32, i32) {
    %c0_i32 = arith.constant 0 : i32
    %c0_i32_0 = arith.constant 0 : i32
    %c0_i32_1 = arith.constant 0 : i32
    return %c0_i32, %c0_i32_0 : i32, i32
  }
  func.func @transform_5(%arg0: i32, %arg1: i32) -> (i32, i32, i32) {
    %c0_i32 = arith.constant 0 : i32
    %c0_i32_0 = arith.constant 0 : i32
    return %arg1, %arg0, %c0_i32 : i32, i32, i32
  }
}

</mosaic_0001>

<llo_original>
// kernel: mgu_forward.1
$region0: #{mgu_forward.1}
  #allocation0 [shape = 'u32[]', space=smem, size = 0x4, offset = 0x4, fixed_abs, tag = 'smem constant byte address 0x4 - core index']
  #allocation1 [shape = 'u32[72,128]{1,0:T(1,128)}', space=vmem, size = 0x9000, scoped, tag = 'internal scratch']
  #allocation2 [shape = 'f32[8,8,128]{2,1,0:T(8,128)}', space=vmem, size = 0x8000, scoped, tag = 'scratch operand']
  #allocation3 [shape = 'f32[8,128]{1,0:T(8,128)}', space=vmem, size = 0x1000, scoped, tag = 'scratch operand']
  %s0 = inlined_call_operand.vmem [shape: f32[8,8,16], index: 0, kind: input, shape index: {}]
  %s1 = inlined_call_operand.vmem [shape: f32[16,128], index: 1, kind: input, shape index: {}]
  %s2 = inlined_call_operand.vmem [shape: f32[1,128], index: 2, kind: input, shape index: {}]
  %s3 = inlined_call_operand.vmem [shape: f32[128,128], index: 3, kind: input, shape index: {}]
  %s4 = inlined_call_operand.vmem [shape: f32[1,128], index: 4, kind: input, shape index: {}]
  %s5 = inlined_call_operand.vmem [shape: f32[8,8,128], index: 5, kind: output, shape index: {}]
  %s6 = sld [smem:[#allocation0]]
  $region34: #{mgu_forward.1} parent=0
    _
  %s8 = ssub.s32 1, %s6
  %s9 = scalar_select 0, %s8, %s6
  // Predicated region
  $region2: #{mgu_forward.1} parent=0 // pred_check
    _
  $region3: #{mgu_forward.1} parent=0 // pred_check_branch
    %11 = sbr.rel (0) target = $region5
  $region4: #{mgu_forward.1} parent=0 // pred_region
    _
  $region5: #{mgu_forward.1} parent=0 // pred_fallthru
    _
  // Predicated region
  $region6: #{mgu_forward.1} parent=0 // pred_check
    _
  $region7: #{mgu_forward.1} parent=0 // pred_check_branch
    %13 = sbr.rel (0) target = $region9
  $region8: #{mgu_forward.1} parent=0 // pred_region
    _
  $region9: #{mgu_forward.1} parent=0 // pred_fallthru
    _
  // Predicated region
  $region10: #{mgu_forward.1} parent=0 // pred_check
    _
  $region11: #{mgu_forward.1} parent=0 // pred_check_branch
    %15 = sbr.rel (0) target = $region13
  $region12: #{mgu_forward.1} parent=0 // pred_region
    _
  $region13: #{mgu_forward.1} parent=0 // pred_fallthru
    _
  // Predicated region
  $region14: #{mgu_forward.1} parent=0 // pred_check
    _
  $region15: #{mgu_forward.1} parent=0 // pred_check_branch
    %17 = sbr.rel (0) target = $region17
  $region16: #{mgu_forward.1} parent=0 // pred_region
    _
  $region17: #{mgu_forward.1} parent=0 // pred_fallthru
    _
  // Predicated region
  $region18: #{mgu_forward.1} parent=0 // pred_check
    _
  $region19: #{mgu_forward.1} parent=0 // pred_check_branch
    %19 = sbr.rel (0) target = $region21
  $region20: #{mgu_forward.1} parent=0 // pred_region
    _
  $region21: #{mgu_forward.1} parent=0 // pred_fallthru
    _
  %p20 = scmp.eq.s32.totalorder 0, 0
  // Predicated region
  $region22: #{mgu_forward.1} parent=0 // pred_check
    %p21 = pneg %p20
  $region23: #{mgu_forward.1} parent=0 // pred_check_branch
    %23 = sbr.rel (%p21) target = $region25
  $region24: #{mgu_forward.1} parent=0 // pred_region
    %24 = vst [vmem:[#allocation3] sm:$0xff] 0.0
  $region25: #{mgu_forward.1} parent=0 // pred_fallthru
    _
  %v25 = vld [vmem:[%s0] sm:$0xff]
  %v26 = vld [vmem:[%s0 + $0x8] sm:$0xff]
  %v27 = vld [vmem:[%s0 + $0x10] sm:$0xff]
  %v28 = vld [vmem:[%s0 + $0x18] sm:$0xff]
  %v29 = vld [vmem:[%s0 + $0x20] sm:$0xff]
  %v30 = vld [vmem:[%s0 + $0x28] sm:$0xff]
  %v31 = vld [vmem:[%s0 + $0x30] sm:$0xff]
  %v32 = vld [vmem:[%s0 + $0x38] sm:$0xff]
  %v33 = vld [vmem:[%s1] sm:$0xff]
  %v34 = vld [vmem:[%s1 + $0x8] sm:$0xff]
  %v35 = vld [vmem:[%s2] sm:$0x1]
  %v37 = vperm.slane %v35, 0
  %vm39 = vcmask 130048
  %v41 = vsel %vm39, %v25, 0
  %v44 = vsel %vm39, %v26, 0
  %v47 = vsel %vm39, %v27, 0
  %v50 = vsel %vm39, %v28, 0
  %v53 = vsel %vm39, %v29, 0
  %v56 = vsel %vm39, %v30, 0
  %v59 = vsel %vm39, %v31, 0
  %v62 = vsel %vm39, %v32, 0
  %64 = vmatpush.msra.mxu0 0.0
  %65 = vmatpush.msra.mxu0 0.0
  %66 = vmatpush.msra.mxu0 0.0
  %67 = vmatpush.msra.mxu0 0.0
  %68 = vmatpush.msra.mxu0 0.0
  %69 = vmatpush.msra.mxu0 0.0
  %70 = vmatpush.msra.mxu0 0.0
  %71 = vmatpush.msra.mxu0 0.0
  %72 = vmatpush.msra.mxu0 0.0
  %73 = vmatpush.msra.mxu0 0.0
  %74 = vmatpush.msra.mxu0 0.0
  %75 = vmatpush.msra.mxu0 0.0
  %76 = vmatpush.msra.mxu0 0.0
  %77 = vmatpush.msra.mxu0 0.0
  %78 = vmatpush.msra.mxu0 %v34
  %79 = vmatpush.msra.mxu0 %v33
  %80 = vmatmul.f32.gmra.mxu0 %v41
  %v81 = vpop.f32.mrf.mxu0
  %v82 = vadd.f32 %v37, %v81
  %83 = vmatmul.f32.gmra.mxu0 %v44
  %v84 = vpop.f32.mrf.mxu0
  %v85 = vadd.f32 %v37, %v84
  %86 = vmatmul.f32.gmra.mxu0 %v47
  %v87 = vpop.f32.mrf.mxu0
  %v88 = vadd.f32 %v37, %v87
  %89 = vmatmul.f32.gmra.mxu0 %v50
  %v90 = vpop.f32.mrf.mxu0
  %v91 = vadd.f32 %v37, %v90
  %92 = vmatmul.f32.gmra.mxu0 %v53
  %v93 = vpop.f32.mrf.mxu0
  %v94 = vadd.f32 %v37, %v93
  %95 = vmatmul.f32.gmra.mxu0 %v56
  %v96 = vpop.f32.mrf.mxu0
  %v97 = vadd.f32 %v37, %v96
  %98 = vmatmul.f32.gmra.mxu0 %v59
  %v99 = vpop.f32.mrf.mxu0
  %v100 = vadd.f32 %v37, %v99
  %101 = vmatmul.f32.gmra.mxu0 %v62
  %v102 = vpop.f32.mrf.mxu0
  %v103 = vadd.f32 %v37, %v102
  %104 = vdwg.mxu0
  %v105 = vsub.f32 0.0, %v82
  %v106 = vsub.f32 0.0, %v85
  %v107 = vsub.f32 0.0, %v88
  %v108 = vsub.f32 0.0, %v91
  %v109 = vsub.f32 0.0, %v94
  %v110 = vsub.f32 0.0, %v97
  %v111 = vsub.f32 0.0, %v100
  %v112 = vsub.f32 0.0, %v103
  %v113 = vmul.f32 %v105, 1.442695
  %v114 = vpow.pop %v113
  %v115 = vmul.f32 %v106, 1.442695
  %v116 = vpow.pop %v115
  %v117 = vmul.f32 %v107, 1.442695
  %v118 = vpow.pop %v117
  %v119 = vmul.f32 %v108, 1.442695
  %v120 = vpow.pop %v119
  %v121 = vmul.f32 %v109, 1.442695
  %v122 = vpow.pop %v121
  %v123 = vmul.f32 %v110, 1.442695
  %v124 = vpow.pop %v123
  %v125 = vmul.f32 %v111, 1.442695
  %v126 = vpow.pop %v125
  %v127 = vmul.f32 %v112, 1.442695
  %v128 = vpow.pop %v127
  %v129 = vadd.f32 %v114, 1.0
  %v130 = vadd.f32 %v116, 1.0
  %v131 = vadd.f32 %v118, 1.0
  %v132 = vadd.f32 %v120, 1.0
  %v133 = vadd.f32 %v122, 1.0
  %v134 = vadd.f32 %v124, 1.0
  %v135 = vadd.f32 %v126, 1.0
  %v136 = vadd.f32 %v128, 1.0
  %v137 = vrcp.pop %v129
  %v138 = vmul.f32 %v129, %v137
  %v139 = vsub.f32 1.0, %v138
  %v140 = vmul.f32 %v137, %v139
  %v141 = vadd.f32 %v137, %v140
  %vm142 = vweird.f32 %v129
  %vm143 = vweird.f32 %v137
  %vm144 = vmor %vm142, %vm143
  %v145 = vsel %vm144, %v137, %v141
  %v146 = vand.u32 2147483647, %v129
  %vm147 = vcmp.eq.f32.partialorder %v146, 8.507059e+37
  %v148 = vand.u32 %v129, 2147483648
  %v149 = vor.u32 1.1754944e-38, %v148
  %v150 = vsel %vm147, %v149, %v145
  %v151 = vmul.f32 1.0, %v150
  %v152 = vrcp.pop %v130
  %v153 = vmul.f32 %v130, %v152
  %v154 = vsub.f32 1.0, %v153
  %v155 = vmul.f32 %v152, %v154
  %v156 = vadd.f32 %v152, %v155
  %vm157 = vweird.f32 %v130
  %vm158 = vweird.f32 %v152
  %vm159 = vmor %vm157, %vm158
  %v160 = vsel %vm159, %v152, %v156
  %v161 = vand.u32 2147483647, %v130
  %vm162 = vcmp.eq.f32.partialorder %v161, 8.507059e+37
  %v163 = vand.u32 %v130, 2147483648
  %v164 = vor.u32 1.1754944e-38, %v163
  %v165 = vsel %vm162, %v164, %v160
  %v166 = vmul.f32 1.0, %v165
  %v167 = vrcp.pop %v131
  %v168 = vmul.f32 %v131, %v167
  %v169 = vsub.f32 1.0, %v168
  %v170 = vmul.f32 %v167, %v169
  %v171 = vadd.f32 %v167, %v170
  %vm172 = vweird.f32 %v131
  %vm173 = vweird.f32 %v167
  %vm174 = vmor %vm172, %vm173
  %v175 = vsel %vm174, %v167, %v171
  %v176 = vand.u32 2147483647, %v131
  %vm177 = vcmp.eq.f32.partialorder %v176, 8.507059e+37
  %v178 = vand.u32 %v131, 2147483648
  %v179 = vor.u32 1.1754944e-38, %v178
  %v180 = vsel %vm177, %v179, %v175
  %v181 = vmul.f32 1.0, %v180
  %v182 = vrcp.pop %v132
  %v183 = vmul.f32 %v132, %v182
  %v184 = vsub.f32 1.0, %v183
  %v185 = vmul.f32 %v182, %v184
  %v186 = vadd.f32 %v182, %v185
  %vm187 = vweird.f32 %v132
  %vm188 = vweird.f32 %v182
  %vm189 = vmor %vm187, %vm188
  %v190 = vsel %vm189, %v182, %v186
  %v191 = vand.u32 2147483647, %v132
  %vm192 = vcmp.eq.f32.partialorder %v191, 8.507059e+37
  %v193 = vand.u32 %v132, 2147483648
  %v194 = vor.u32 1.1754944e-38, %v193
  %v195 = vsel %vm192, %v194, %v190
  %v196 = vmul.f32 1.0, %v195
  %v197 = vrcp.pop %v133
  %v198 = vmul.f32 %v133, %v197
  %v199 = vsub.f32 1.0, %v198
  %v200 = vmul.f32 %v197, %v199
  %v201 = vadd.f32 %v197, %v200
  %vm202 = vweird.f32 %v133
  %vm203 = vweird.f32 %v197
  %vm204 = vmor %vm202, %vm203
  %v205 = vsel %vm204, %v197, %v201
  %v206 = vand.u32 2147483647, %v133
  %vm207 = vcmp.eq.f32.partialorder %v206, 8.507059e+37
  %v208 = vand.u32 %v133, 2147483648
  %v209 = vor.u32 1.1754944e-38, %v208
  %v210 = vsel %vm207, %v209, %v205
  %v211 = vmul.f32 1.0, %v210
  %v212 = vrcp.pop %v134
  %v213 = vmul.f32 %v134, %v212
  %v214 = vsub.f32 1.0, %v213
  %v215 = vmul.f32 %v212, %v214
  %v216 = vadd.f32 %v212, %v215
  %vm217 = vweird.f32 %v134
  %vm218 = vweird.f32 %v212
  %vm219 = vmor %vm217, %vm218
  %v220 = vsel %vm219, %v212, %v216
  %v221 = vand.u32 2147483647, %v134
  %vm222 = vcmp.eq.f32.partialorder %v221, 8.507059e+37
  %v223 = vand.u32 %v134, 2147483648
  %v224 = vor.u32 1.1754944e-38, %v223
  %v225 = vsel %vm222, %v224, %v220
  %v226 = vmul.f32 1.0, %v225
  %v227 = vrcp.pop %v135
  %v228 = vmul.f32 %v135, %v227
  %v229 = vsub.f32 1.0, %v228
  %v230 = vmul.f32 %v227, %v229
  %v231 = vadd.f32 %v227, %v230
  %vm232 = vweird.f32 %v135
  %vm233 = vweird.f32 %v227
  %vm234 = vmor %vm232, %vm233
  %v235 = vsel %vm234, %v227, %v231
  %v236 = vand.u32 2147483647, %v135
  %vm237 = vcmp.eq.f32.partialorder %v236, 8.507059e+37
  %v238 = vand.u32 %v135, 2147483648
  %v239 = vor.u32 1.1754944e-38, %v238
  %v240 = vsel %vm237, %v239, %v235
  %v241 = vmul.f32 1.0, %v240
  %v242 = vrcp.pop %v136
  %v243 = vmul.f32 %v136, %v242
  %v244 = vsub.f32 1.0, %v243
  %v245 = vmul.f32 %v242, %v244
  %v246 = vadd.f32 %v242, %v245
  %vm247 = vweird.f32 %v136
  %vm248 = vweird.f32 %v242
  %vm249 = vmor %vm247, %vm248
  %v250 = vsel %vm249, %v242, %v246
  %v251 = vand.u32 2147483647, %v136
  %vm252 = vcmp.eq.f32.partialorder %v251, 8.507059e+37
  %v253 = vand.u32 %v136, 2147483648
  %v254 = vor.u32 1.1754944e-38, %v253
  %v255 = vsel %vm252, %v254, %v250
  %v256 = vmul.f32 1.0, %v255
  %257 = vst [vmem:[#allocation2] sm:$0xff] %v151
  %258 = vst [vmem:[#allocation2 + $0x8] sm:$0xff] %v166
  %259 = vst [vmem:[#allocation2 + $0x10] sm:$0xff] %v181
  %260 = vst [vmem:[#allocation2 + $0x18] sm:$0xff] %v196
  %261 = vst [vmem:[#allocation2 + $0x20] sm:$0xff] %v211
  %262 = vst [vmem:[#allocation2 + $0x28] sm:$0xff] %v226
  %263 = vst [vmem:[#allocation2 + $0x30] sm:$0xff] %v241
  %264 = vst [vmem:[#allocation2 + $0x38] sm:$0xff] %v256
  %v265 = vld [vmem:[%s3] sm:$0xff]
  %v266 = vld [vmem:[%s3 + $0x8] sm:$0xff]
  %v267 = vld [vmem:[%s3 + $0x10] sm:$0xff]
  %v268 = vld [vmem:[%s3 + $0x18] sm:$0xff]
  %v269 = vld [vmem:[%s3 + $0x20] sm:$0xff]
  %v270 = vld [vmem:[%s3 + $0x28] sm:$0xff]
  %v271 = vld [vmem:[%s3 + $0x30] sm:$0xff]
  %v272 = vld [vmem:[%s3 + $0x38] sm:$0xff]
  %v273 = vld [vmem:[%s3 + $0x40] sm:$0xff]
  %v274 = vld [vmem:[%s3 + $0x48] sm:$0xff]
  %v275 = vld [vmem:[%s3 + $0x50] sm:$0xff]
  %v276 = vld [vmem:[%s3 + $0x58] sm:$0xff]
  %v277 = vld [vmem:[%s3 + $0x60] sm:$0xff]
  %v278 = vld [vmem:[%s3 + $0x68] sm:$0xff]
  %v279 = vld [vmem:[%s3 + $0x70] sm:$0xff]
  %v280 = vld [vmem:[%s3 + $0x78] sm:$0xff]
  %v281 = vld [vmem:[%s4] sm:$0x1]
  %v283 = vperm.slane %v281, 0
  %v285 = vld [vmem:[#allocation3] sm:$0xff]
  %v286 = vld [vmem:[#allocation2] sm:$0xff]
  %287 = vmatpush.msra.mxu0 %v280
  %288 = vmatpush.msra.mxu0 %v279
  %289 = vmatpush.msra.mxu0 %v278
  %290 = vmatpush.msra.mxu0 %v277
  %291 = vmatpush.msra.mxu0 %v276
  %292 = vmatpush.msra.mxu0 %v275
  %293 = vmatpush.msra.mxu0 %v274
  %294 = vmatpush.msra.mxu0 %v273
  %295 = vmatpush.msra.mxu0 %v272
  %296 = vmatpush.msra.mxu0 %v271
  %297 = vmatpush.msra.mxu0 %v270
  %298 = vmatpush.msra.mxu0 %v269
  %299 = vmatpush.msra.mxu0 %v268
  %300 = vmatpush.msra.mxu0 %v267
  %301 = vmatpush.msra.mxu0 %v266
  %302 = vmatpush.msra.mxu0 %v265
  %303 = vmatmul.f32.gmra.mxu0 %v285
  %v304 = vpop.f32.mrf.mxu0
  %v305 = vadd.f32 %v283, %v304
  %306 = vdwg.mxu0
  %v307 = vtanh.pop %v305
  %v308 = vsub.f32 %v285, %v307
  %v309 = vmul.f32 %v286, %v308
  %v310 = vadd.f32 %v307, %v309
  %311 = vst [vmem:[%s5] sm:$0xff] %v310
  %s312 = scalar_lea.vmem [#allocation2], 8
  %v313 = vld [vmem:[%s312] sm:$0xff]
  %314 = vmatpush.msra.mxu0 %v280
  %315 = vmatpush.msra.mxu0 %v279
  %316 = vmatpush.msra.mxu0 %v278
  %317 = vmatpush.msra.mxu0 %v277
  %318 = vmatpush.msra.mxu0 %v276
  %319 = vmatpush.msra.mxu0 %v275
  %320 = vmatpush.msra.mxu0 %v274
  %321 = vmatpush.msra.mxu0 %v273
  %322 = vmatpush.msra.mxu0 %v272
  %323 = vmatpush.msra.mxu0 %v271
  %324 = vmatpush.msra.mxu0 %v270
  %325 = vmatpush.msra.mxu0 %v269
  %326 = vmatpush.msra.mxu0 %v268
  %327 = vmatpush.msra.mxu0 %v267
  %328 = vmatpush.msra.mxu0 %v266
  %329 = vmatpush.msra.mxu0 %v265
  %330 = vmatmul.f32.gmra.mxu0 %v310
  %v331 = vpop.f32.mrf.mxu0
  %v332 = vadd.f32 %v283, %v331
  %333 = vdwg.mxu0
  %v334 = vtanh.pop %v332
  %v335 = vsub.f32 %v310, %v334
  %v336 = vmul.f32 %v313, %v335
  %v337 = vadd.f32 %v334, %v336
  %s338 = scalar_lea.vmem %s5, 8
  %339 = vst [vmem:[%s338] sm:$0xff] %v337
  %s340 = scalar_lea.vmem [#allocation2], 16
  %v341 = vld [vmem:[%s340] sm:$0xff]
  %342 = vmatpush.msra.mxu0 %v280
  %343 = vmatpush.msra.mxu0 %v279
  %344 = vmatpush.msra.mxu0 %v278
  %345 = vmatpush.msra.mxu0 %v277
  %346 = vmatpush.msra.mxu0 %v276
  %347 = vmatpush.msra.mxu0 %v275
  %348 = vmatpush.msra.mxu0 %v274
  %349 = vmatpush.msra.mxu0 %v273
  %350 = vmatpush.msra.mxu0 %v272
  %351 = vmatpush.msra.mxu0 %v271
  %352 = vmatpush.msra.mxu0 %v270
  %353 = vmatpush.msra.mxu0 %v269
  %354 = vmatpush.msra.mxu0 %v268
  %355 = vmatpush.msra.mxu0 %v267
  %356 = vmatpush.msra.mxu0 %v266
  %357 = vmatpush.msra.mxu0 %v265
  %358 = vmatmul.f32.gmra.mxu0 %v337
  %v359 = vpop.f32.mrf.mxu0
  %v360 = vadd.f32 %v283, %v359
  %361 = vdwg.mxu0
  %v362 = vtanh.pop %v360
  %v363 = vsub.f32 %v337, %v362
  %v364 = vmul.f32 %v341, %v363
  %v365 = vadd.f32 %v362, %v364
  %s366 = scalar_lea.vmem %s5, 16
  %367 = vst [vmem:[%s366] sm:$0xff] %v365
  %s368 = scalar_lea.vmem [#allocation2], 24
  %v369 = vld [vmem:[%s368] sm:$0xff]
  %370 = vmatpush.msra.mxu0 %v280
  %371 = vmatpush.msra.mxu0 %v279
  %372 = vmatpush.msra.mxu0 %v278
  %373 = vmatpush.msra.mxu0 %v277
  %374 = vmatpush.msra.mxu0 %v276
  %375 = vmatpush.msra.mxu0 %v275
  %376 = vmatpush.msra.mxu0 %v274
  %377 = vmatpush.msra.mxu0 %v273
  %378 = vmatpush.msra.mxu0 %v272
  %379 = vmatpush.msra.mxu0 %v271
  %380 = vmatpush.msra.mxu0 %v270
  %381 = vmatpush.msra.mxu0 %v269
  %382 = vmatpush.msra.mxu0 %v268
  %383 = vmatpush.msra.mxu0 %v267
  %384 = vmatpush.msra.mxu0 %v266
  %385 = vmatpush.msra.mxu0 %v265
  %386 = vmatmul.f32.gmra.mxu0 %v365
  %v387 = vpop.f32.mrf.mxu0
  %v388 = vadd.f32 %v283, %v387
  %389 = vdwg.mxu0
  %v390 = vtanh.pop %v388
  %v391 = vsub.f32 %v365, %v390
  %v392 = vmul.f32 %v369, %v391
  %v393 = vadd.f32 %v390, %v392
  %s394 = scalar_lea.vmem %s5, 24
  %395 = vst [vmem:[%s394] sm:$0xff] %v393
  %s396 = scalar_lea.vmem [#allocation2], 32
  %v397 = vld [vmem:[%s396] sm:$0xff]
  %398 = vmatpush.msra.mxu0 %v280
  %399 = vmatpush.msra.mxu0 %v279
  %400 = vmatpush.msra.mxu0 %v278
  %401 = vmatpush.msra.mxu0 %v277
  %402 = vmatpush.msra.mxu0 %v276
  %403 = vmatpush.msra.mxu0 %v275
  %404 = vmatpush.msra.mxu0 %v274
  %405 = vmatpush.msra.mxu0 %v273
  %406 = vmatpush.msra.mxu0 %v272
  %407 = vmatpush.msra.mxu0 %v271
  %408 = vmatpush.msra.mxu0 %v270
  %409 = vmatpush.msra.mxu0 %v269
  %410 = vmatpush.msra.mxu0 %v268
  %411 = vmatpush.msra.mxu0 %v267
  %412 = vmatpush.msra.mxu0 %v266
  %413 = vmatpush.msra.mxu0 %v265
  %414 = vmatmul.f32.gmra.mxu0 %v393
  %v415 = vpop.f32.mrf.mxu0
  %v416 = vadd.f32 %v283, %v415
  %417 = vdwg.mxu0
  %v418 = vtanh.pop %v416
  %v419 = vsub.f32 %v393, %v418
  %v420 = vmul.f32 %v397, %v419
  %v421 = vadd.f32 %v418, %v420
  %s422 = scalar_lea.vmem %s5, 32
  %423 = vst [vmem:[%s422] sm:$0xff] %v421
  %s424 = scalar_lea.vmem [#allocation2], 40
  %v425 = vld [vmem:[%s424] sm:$0xff]
  %426 = vmatpush.msra.mxu0 %v280
  %427 = vmatpush.msra.mxu0 %v279
  %428 = vmatpush.msra.mxu0 %v278
  %429 = vmatpush.msra.mxu0 %v277
  %430 = vmatpush.msra.mxu0 %v276
  %431 = vmatpush.msra.mxu0 %v275
  %432 = vmatpush.msra.mxu0 %v274
  %433 = vmatpush.msra.mxu0 %v273
  %434 = vmatpush.msra.mxu0 %v272
  %435 = vmatpush.msra.mxu0 %v271
  %436 = vmatpush.msra.mxu0 %v270
  %437 = vmatpush.msra.mxu0 %v269
  %438 = vmatpush.msra.mxu0 %v268
  %439 = vmatpush.msra.mxu0 %v267
  %440 = vmatpush.msra.mxu0 %v266
  %441 = vmatpush.msra.mxu0 %v265
  %442 = vmatmul.f32.gmra.mxu0 %v421
  %v443 = vpop.f32.mrf.mxu0
  %v444 = vadd.f32 %v283, %v443
  %445 = vdwg.mxu0
  %v446 = vtanh.pop %v444
  %v447 = vsub.f32 %v421, %v446
  %v448 = vmul.f32 %v425, %v447
  %v449 = vadd.f32 %v446, %v448
  %s450 = scalar_lea.vmem %s5, 40
  %451 = vst [vmem:[%s450] sm:$0xff] %v449
  %s452 = scalar_lea.vmem [#allocation2], 48
  %v453 = vld [vmem:[%s452] sm:$0xff]
  %454 = vmatpush.msra.mxu0 %v280
  %455 = vmatpush.msra.mxu0 %v279
  %456 = vmatpush.msra.mxu0 %v278
  %457 = vmatpush.msra.mxu0 %v277
  %458 = vmatpush.msra.mxu0 %v276
  %459 = vmatpush.msra.mxu0 %v275
  %460 = vmatpush.msra.mxu0 %v274
  %461 = vmatpush.msra.mxu0 %v273
  %462 = vmatpush.msra.mxu0 %v272
  %463 = vmatpush.msra.mxu0 %v271
  %464 = vmatpush.msra.mxu0 %v270
  %465 = vmatpush.msra.mxu0 %v269
  %466 = vmatpush.msra.mxu0 %v268
  %467 = vmatpush.msra.mxu0 %v267
  %468 = vmatpush.msra.mxu0 %v266
  %469 = vmatpush.msra.mxu0 %v265
  %470 = vmatmul.f32.gmra.mxu0 %v449
  %v471 = vpop.f32.mrf.mxu0
  %v472 = vadd.f32 %v283, %v471
  %473 = vdwg.mxu0
  %v474 = vtanh.pop %v472
  %v475 = vsub.f32 %v449, %v474
  %v476 = vmul.f32 %v453, %v475
  %v477 = vadd.f32 %v474, %v476
  %s478 = scalar_lea.vmem %s5, 48
  %479 = vst [vmem:[%s478] sm:$0xff] %v477
  %s480 = scalar_lea.vmem [#allocation2], 56
  %v481 = vld [vmem:[%s480] sm:$0xff]
  %482 = vmatpush.msra.mxu0 %v280
  %483 = vmatpush.msra.mxu0 %v279
  %484 = vmatpush.msra.mxu0 %v278
  %485 = vmatpush.msra.mxu0 %v277
  %486 = vmatpush.msra.mxu0 %v276
  %487 = vmatpush.msra.mxu0 %v275
  %488 = vmatpush.msra.mxu0 %v274
  %489 = vmatpush.msra.mxu0 %v273
  %490 = vmatpush.msra.mxu0 %v272
  %491 = vmatpush.msra.mxu0 %v271
  %492 = vmatpush.msra.mxu0 %v270
  %493 = vmatpush.msra.mxu0 %v269
  %494 = vmatpush.msra.mxu0 %v268
  %495 = vmatpush.msra.mxu0 %v267
  %496 = vmatpush.msra.mxu0 %v266
  %497 = vmatpush.msra.mxu0 %v265
  %498 = vmatmul.f32.gmra.mxu0 %v477
  %v499 = vpop.f32.mrf.mxu0
  %v500 = vadd.f32 %v283, %v499
  %501 = vdwg.mxu0
  %v502 = vtanh.pop %v500
  %v503 = vsub.f32 %v477, %v502
  %v504 = vmul.f32 %v481, %v503
  %v505 = vadd.f32 %v502, %v504
  %s506 = scalar_lea.vmem %s5, 56
  %507 = vst [vmem:[%s506] sm:$0xff] %v505
  %508 = vst [vmem:[#allocation3] sm:$0xff] %v505
  // Predicated region
  $region26: #{mgu_forward.1} parent=0 // pred_check
    _
  $region27: #{mgu_forward.1} parent=0 // pred_check_branch
    %510 = sbr.rel (0) target = $region29
  $region28: #{mgu_forward.1} parent=0 // pred_region
    _
  $region29: #{mgu_forward.1} parent=0 // pred_fallthru
    _
  // Predicated region
  $region30: #{mgu_forward.1} parent=0 // pred_check
    _
  $region31: #{mgu_forward.1} parent=0 // pred_check_branch
    %512 = sbr.rel (0) target = $region33
  $region32: #{mgu_forward.1} parent=0 // pred_region
    _
  $region33: #{mgu_forward.1} parent=0 // pred_fallthru
    _

</llo_original>
